<compile_context>
chip_gen: v7x
topology: tpu7x:2x2x1
jax: 0.10.0
libtpu: 0.0.40
codegen_flags: <defaults>
</compile_context>

<pallas_src>
import functools
import math

import jax
import jax.numpy as jnp
from jax.experimental import pallas as pl
from jax.experimental.pallas import tpu as pltpu


# ----------------------------- helpers ------------------------------------ #

def _round_up(x, m):
    return (x + m - 1) // m * m


def _vmem_limit(need_bytes, *, slack=8 << 20, floor=32 << 20, cap=64 << 20):
    """Explicit scoped-VMEM budget (v5e default is only 16 MiB; v7x physical 64 MiB)."""
    return int(min(cap, max(floor, 2 * int(need_bytes) + slack)))


# ----------------------------- kernels ------------------------------------ #

def _qkv_kernel(x_ref, w_ref, b_ref, o_ref):
    # x_ref: (tm, H)   row tile of flattened hidden_states
    # w_ref: (H, 3H)   stacked [Wq | Wk | Wv]   (resident across the grid)
    # b_ref: (1, 3H)   stacked bias
    # Native-dtype operands on the MXU; f32 accumulator only.
    acc = jnp.dot(x_ref[...], w_ref[...], preferred_element_type=jnp.float32)
    acc = acc + b_ref[...].astype(jnp.float32)
    o_ref[...] = acc.astype(o_ref.dtype)


def _mha_kernel(q_ref, k_ref, v_ref, m_ref, o_ref, *, scale):
    # q_ref/k_ref/v_ref: (1, S, d) for one (batch, head); m_ref: (1, 1, S) additive mask
    q = q_ref[0]                      # (S, d)
    k = k_ref[0]                      # (S, d)
    v = v_ref[0]                      # (S, d)

    # scores = Q K^T / sqrt(d) + mask   (MXU dot, f32 accumulation)
    s = jax.lax.dot_general(q, k, (((1,), (1,)), ((), ())),
                            preferred_element_type=jnp.float32)
    s = s * scale + m_ref[0].astype(jnp.float32)          # (S, S) + (1, S)

    # softmax over the key axis (f32)
    s_max = jnp.max(s, axis=-1, keepdims=True)
    p = jnp.exp(s - s_max)
    denom = jnp.sum(p, axis=-1, keepdims=True)

    # TODO(synk): training-mode attention dropout / head_mask not implemented
    # (eval-mode identity, head_mask=None).

    ctx = jnp.dot(p.astype(v.dtype), v, preferred_element_type=jnp.float32)
    ctx = ctx / denom
    o_ref[0] = ctx.astype(o_ref.dtype)


# ----------------------------- wrappers ----------------------------------- #

def _fused_qkv(x, w_qkv, b_qkv, *, row_tile):
    M, H = x.shape
    H3 = w_qkv.shape[1]

    # Explicit row tile (multiple of 8 sublanes), grid via padding instead of
    # a hard divisibility assert; keeps the pipeline multi-block at real sizes.
    tm = min(row_tile, _round_up(M, 8))
    m_pad = _round_up(M, tm)
    if m_pad != M:
        x = jnp.pad(x, ((0, m_pad - M), (0, 0)))
    grid = (m_pad // tm,)

    isz = jnp.dtype(x.dtype).itemsize
    wsz = jnp.dtype(w_qkv.dtype).itemsize
    cost = pl.CostEstimate(
        flops=2 * m_pad * H * H3,
        transcendentals=0,
        bytes_accessed=m_pad * H * isz + H * H3 * wsz + m_pad * H3 * isz,
    )
    vmem = _vmem_limit(H * H3 * wsz + 2 * tm * (H + H3) * isz)

    out = pl.pallas_call(
        _qkv_kernel,
        out_shape=jax.ShapeDtypeStruct((m_pad, H3), x.dtype),
        grid_spec=pltpu.PrefetchScalarGridSpec(
            num_scalar_prefetch=0,
            grid=grid,
            in_specs=[
                pl.BlockSpec((tm, H), lambda i: (i, 0)),    # x row tile
                pl.BlockSpec((H, H3), lambda i: (0, 0)),    # stacked weight (resident)
                pl.BlockSpec((1, H3), lambda i: (0, 0)),    # stacked bias
            ],
            out_specs=pl.BlockSpec((tm, H3), lambda i: (i, 0)),
        ),
        compiler_params=pltpu.CompilerParams(
            dimension_semantics=("parallel",),
            vmem_limit_bytes=vmem),
        cost_estimate=cost,
    )(x, w_qkv, b_qkv)
    return out[:M]


def _mha(qh, kh, vh, mask3, *, num_heads, scale):
    BH, S, d = qh.shape
    B = mask3.shape[0]
    isz = jnp.dtype(qh.dtype).itemsize

    cost = pl.CostEstimate(
        flops=4 * BH * S * S * d,
        transcendentals=BH * S * S,
        bytes_accessed=4 * BH * S * d * isz + B * S * 4,
    )
    vmem = _vmem_limit(8 * S * d * isz + 2 * S * S * 4)

    kernel = functools.partial(_mha_kernel, scale=scale)
    return pl.pallas_call(
        kernel,
        out_shape=jax.ShapeDtypeStruct((BH, S, d), qh.dtype),
        grid_spec=pltpu.PrefetchScalarGridSpec(
            num_scalar_prefetch=0,
            grid=(BH,),
            in_specs=[
                pl.BlockSpec((1, S, d), lambda g: (g, 0, 0)),                # Q
                pl.BlockSpec((1, S, d), lambda g: (g, 0, 0)),                # K
                pl.BlockSpec((1, S, d), lambda g: (g, 0, 0)),                # V
                pl.BlockSpec((1, 1, S), lambda g: (g // num_heads, 0, 0)),   # mask
            ],
            out_specs=pl.BlockSpec((1, S, d), lambda g: (g, 0, 0)),
        ),
        compiler_params=pltpu.CompilerParams(
            dimension_semantics=("parallel",),
            vmem_limit_bytes=vmem),
        cost_estimate=cost,
    )(qh, kh, vh, mask3)


def bert_self_attention(hidden_states, attention_mask,
                        wq, bq, wk, bk, wv, bv,
                        *, num_heads, row_tile=256):
    """Standard-attention branch of BertSelfAttention.forward (eval mode).

    hidden_states: [B, S, H]; attention_mask: additive mask broadcastable as
    [B, 1, 1, S] (or [B, S] / [B, 1, S]); returns context_layer [B, S, H].
    """
    # TODO(synk): the adj_dependency_edge_mask branch (cycle_shift n-gram
    # attention, adjacency torch.gather, edge K/V mixing) is not implemented.
    B, S, H = hidden_states.shape
    assert H % num_heads == 0, "hidden_size must be divisible by num_heads"
    d = H // num_heads

    x = hidden_states.reshape(-1, H)                                 # [M, H]

    # Stack the three projections into one resident weight / one MXU pass.
    w_qkv = jnp.concatenate([wq, wk, wv], axis=1)                    # [H, 3H]
    b_qkv = jnp.concatenate([bq, bk, bv]).reshape(1, 3 * H)          # [1, 3H]

    qkv = _fused_qkv(x, w_qkv, b_qkv, row_tile=row_tile)             # [M, 3H]
    q, k, v = jnp.split(qkv, 3, axis=-1)

    def to_heads(t):  # [M, H] -> [B*nh, S, d]  (== transpose_for_scores)
        return (t.reshape(B, S, num_heads, d)
                 .transpose(0, 2, 1, 3)
                 .reshape(B * num_heads, S, d))

    qh, kh, vh = to_heads(q), to_heads(k), to_heads(v)

    if attention_mask is None:
        mask3 = jnp.zeros((B, 1, S), jnp.float32)
    else:
        mask3 = attention_mask.astype(jnp.float32).reshape(B, 1, S)

    ctx = _mha(qh, kh, vh, mask3, num_heads=num_heads,
               scale=1.0 / math.sqrt(d))                             # [B*nh, S, d]

    # permute(0, 2, 1, 3) + view(..., all_head_size)
    context_layer = (ctx.reshape(B, num_heads, S, d)
                        .transpose(0, 2, 1, 3)
                        .reshape(B, S, H))
    return context_layer


# ----------------------------- reference ---------------------------------- #

def _reference(hidden_states, attention_mask, wq, bq, wk, bk, wv, bv, *, num_heads):
    B, S, H = hidden_states.shape
    d = H // num_heads
    q = hidden_states @ wq + bq
    k = hidden_states @ wk + bk
    v = hidden_states @ wv + bv

    def split(t):
        return t.reshape(B, S, num_heads, d).transpose(0, 2, 1, 3)

    q, k, v = split(q), split(k), split(v)
    s = jnp.einsum("bhqd,bhkd->bhqk", q, k) / math.sqrt(d)
    if attention_mask is not None:
        s = s + attention_mask
    p = jax.nn.softmax(s, axis=-1)
    ctx = jnp.einsum("bhqk,bhkd->bhqd", p, v)
    return ctx.transpose(0, 2, 1, 3).reshape(B, S, H)


# ------------------------------- demo -------------------------------------- #

if __name__ == "__main__":
    B, S, H, NH = 2, 8, 32, 4

    key = jax.random.PRNGKey(0)
    ks = jax.random.split(key, 8)

    hidden_states = jax.random.normal(ks[0], (B, S, H), dtype=jnp.float32)

    bound = 1.0 / math.sqrt(H)
    wq = jax.random.uniform(ks[1], (H, H), jnp.float32, -bound, bound)
    wk = jax.random.uniform(ks[2], (H, H), jnp.float32, -bound, bound)
    wv = jax.random.uniform(ks[3], (H, H), jnp.float32, -bound, bound)
    bq = jax.random.uniform(ks[4], (H,), jnp.float32, -bound, bound)
    bk = jax.random.uniform(ks[5], (H,), jnp.float32, -bound, bound)
    bv = jax.random.uniform(ks[6], (H,), jnp.float32, -bound, bound)

    # Standard HF-style additive mask: mask out the last 2 tokens of batch 1.
    key_pad = jnp.ones((B, S), jnp.float32).at[1, -2:].set(0.0)
    attn_mask = (1.0 - key_pad)[:, None, None, :] * -1e9            # [B,1,1,S]

    out = bert_self_attention(hidden_states, attn_mask,
                              wq, bq, wk, bk, wv, bv, num_heads=NH)
    out = jax.block_until_ready(out)

    ref = _reference(hidden_states, attn_mask, wq, bq, wk, bk, wv, bv,
                     num_heads=NH)

    assert out.shape == (B, S, H)
    assert jnp.allclose(out, ref, atol=1e-5, rtol=1e-5), "mismatch vs reference"

    print("KERNEL_OK")
</pallas_src>

<mosaic_0001>
module attributes {stable_mosaic.version = 11 : i64} {
  func.func @_qkv_kernel(%arg0: i32, %arg1: memref<16x32xf32, #tpu.memory_space<vmem>>, %arg2: memref<32x96xf32, #tpu.memory_space<vmem>>, %arg3: memref<1x96xf32, #tpu.memory_space<vmem>>, %arg4: memref<16x96xf32, #tpu.memory_space<vmem>>) attributes {dimension_semantics = [#tpu.dimension_semantics<parallel>], iteration_bounds = array<i64: 1>, scalar_prefetch = 0 : i64, scratch_operands = 0 : i64, tpu.core_type = #tpu.core_type<tc>, window_params = [{transform_indices = @transform_0, window_bounds = array<i64: 16, 32>}, {pipeline_mode = #tpu.pipeline_mode<synchronous>, transform_indices = @transform_1, window_bounds = array<i64: 32, 96>}, {pipeline_mode = #tpu.pipeline_mode<synchronous>, transform_indices = @transform_2, window_bounds = array<i64: 1, 96>}, {transform_indices = @transform_3, window_bounds = array<i64: 16, 96>}]} {
    %c0 = arith.constant 0 : index
    %c0_0 = arith.constant 0 : index
    %0 = vector.load %arg1[%c0, %c0_0] : memref<16x32xf32, #tpu.memory_space<vmem>>, vector<16x32xf32>
    %c0_1 = arith.constant 0 : index
    %c0_2 = arith.constant 0 : index
    %1 = vector.load %arg2[%c0_1, %c0_2] : memref<32x96xf32, #tpu.memory_space<vmem>>, vector<32x96xf32>
    %cst = arith.constant dense<0.000000e+00> : vector<16x96xf32>
    %2 = tpu.matmul %0, %1, %cst {dimension_numbers = #tpu.dot_dimension_numbers<[1], [0], [0], [1], [0, 0, 1, 1], [], []>} : vector<16x32xf32>, vector<32x96xf32>, vector<16x96xf32> -> vector<16x96xf32>
    %c0_3 = arith.constant 0 : index
    %c0_4 = arith.constant 0 : index
    %3 = vector.load %arg3[%c0_3, %c0_4] : memref<1x96xf32, #tpu.memory_space<vmem>>, vector<1x96xf32>
    %4 = vector.broadcast %3 : vector<1x96xf32> to vector<16x96xf32>
    %5 = arith.addf %2, %4 : vector<16x96xf32>
    %c0_5 = arith.constant 0 : index
    %c0_6 = arith.constant 0 : index
    %6 = vector.load %arg4[%c0_5, %c0_6] : memref<16x96xf32, #tpu.memory_space<vmem>>, vector<16x96xf32>
    tpu.vector_store %arg4[%c0_5, %c0_6], %5 {strides = array<i32>} : memref<16x96xf32, #tpu.memory_space<vmem>>, vector<16x96xf32>,
    return
  }
  func.func @transform_0(%arg0: i32) -> (i32, i32) {
    %c0_i32 = arith.constant 0 : i32
    %c0_i32_0 = arith.constant 0 : i32
    return %arg0, %c0_i32 : i32, i32
  }
  func.func @transform_1(%arg0: i32) -> (i32, i32) {
    %c0_i32 = arith.constant 0 : i32
    %c0_i32_0 = arith.constant 0 : i32
    %c0_i32_1 = arith.constant 0 : i32
    return %c0_i32, %c0_i32_0 : i32, i32
  }
  func.func @transform_2(%arg0: i32) -> (i32, i32) {
    %c0_i32 = arith.constant 0 : i32
    %c0_i32_0 = arith.constant 0 : i32
    %c0_i32_1 = arith.constant 0 : i32
    return %c0_i32, %c0_i32_0 : i32, i32
  }
  func.func @transform_3(%arg0: i32) -> (i32, i32) {
    %c0_i32 = arith.constant 0 : i32
    %c0_i32_0 = arith.constant 0 : i32
    return %arg0, %c0_i32 : i32, i32
  }
}

</mosaic_0001>

<llo_original>
// kernel: tpu_custom_call.1
$region0: #{tpu_custom_call.1}
  #allocation0 [shape = 'u32[]', space=smem, size = 0x4, offset = 0x4, fixed_abs, tag = 'smem constant byte address 0x4 - core index']
  #allocation1 [shape = 'u32[144,128]{1,0:T(1,128)}', space=vmem, size = 0x12000, scoped, tag = 'internal scratch']
  %s0 = inlined_call_operand.hbm [shape: f32[16,32], index: 0, kind: input, shape index: {}]
  %s1 = inlined_call_operand.hbm [shape: f32[32,96], index: 1, kind: input, shape index: {}]
  %s2 = inlined_call_operand.vmem [shape: f32[1,96], index: 2, kind: input, shape index: {}]
  %s3 = inlined_call_operand.hbm [shape: f32[16,96], index: 3, kind: output, shape index: {}]
  %s4 = sld [smem:[#allocation0]]
  $region30: #{tpu_custom_call.1} parent=0
    _
  %s6 = ssub.s32 1, %s4
  %s7 = scalar_select 0, %s6, %s4
  $region1: #{tpu_custom_call.1} parent=0
    #allocation2 [shape = 'u8[8192]{0}', space=vmem, size = 0x2000, scoped, tag = 'input window, operand 0, single buffered']
    #allocation3 [shape = 's32[1]{0}', space=sflag, size = 0x4, scoped, tag = 'scoped memory for tpu_custom_call.1']
    #allocation4 [shape = 's32[1]{0}', space=sflag, size = 0x4, scoped, tag = 'scoped memory for tpu_custom_call.1']
    #allocation5 [shape = 'u8[16384]{0}', space=vmem, size = 0x4000, scoped, tag = 'input window, operand 1, single buffered']
    #allocation6 [shape = 's32[1]{0}', space=sflag, size = 0x4, scoped, tag = 'scoped memory for tpu_custom_call.1']
    #allocation7 [shape = 'u8[8192]{0}', space=vmem, size = 0x2000, scoped, tag = 'output window, operand 0, single buffered']
    %8 = vsyncpa [#allocation3], 0
    %9 = vsyncpa [#allocation6], 0
    %10 = vsyncpa [#allocation4], 0
    // Predicated region
    $region2: #{tpu_custom_call.1} parent=1 // pred_check
      _
    $region3: #{tpu_custom_call.1} parent=1 // pred_check_branch
      %12 = sbr.rel (0) target = $region5
    $region4: #{tpu_custom_call.1} parent=1 // pred_region
      %s14 = ssub.s32 256, 256
      %15 = vsyncadd [#allocation3], %s14
      %s16 = sshll.u32 [#allocation2], 4
      %s17 = int_to_ptr.vmem [resolvable:$true] %s16
      %22 = dma.hbm_to_vmem [thread:$0]  %s0, 256, %s17, [#allocation3], 128, 128, 8
    $region5: #{tpu_custom_call.1} parent=1 // pred_fallthru
      _
    // Predicated region
    $region6: #{tpu_custom_call.1} parent=1 // pred_check
      _
    $region7: #{tpu_custom_call.1} parent=1 // pred_check_branch
      %24 = sbr.rel (0) target = $region9
    $region8: #{tpu_custom_call.1} parent=1 // pred_region
      %s26 = ssub.s32 512, 512
      %27 = vsyncadd [#allocation6], %s26
      %s28 = sshll.u32 [#allocation5], 4
      %s29 = int_to_ptr.vmem [resolvable:$true] %s28
      %34 = dma.hbm_to_vmem [thread:$0]  %s1, 512, %s29, [#allocation6], 128, 128, 8
    $region9: #{tpu_custom_call.1} parent=1 // pred_fallthru
      _
    // Predicated region
    $region10: #{tpu_custom_call.1} parent=1 // pred_check
      _
    $region11: #{tpu_custom_call.1} parent=1 // pred_check_branch
      %36 = sbr.rel (0) target = $region13
    $region12: #{tpu_custom_call.1} parent=1 // pred_region
      _
    $region13: #{tpu_custom_call.1} parent=1 // pred_fallthru
      _
    // Predicated region
    $region14: #{tpu_custom_call.1} parent=1 // pred_check
      _
    $region15: #{tpu_custom_call.1} parent=1 // pred_check_branch
      %38 = sbr.rel (0) target = $region17
    $region16: #{tpu_custom_call.1} parent=1 // pred_region
      %39 = dma.done [#allocation3], 256
    $region17: #{tpu_custom_call.1} parent=1 // pred_fallthru
      _
    // Predicated region
    $region18: #{tpu_custom_call.1} parent=1 // pred_check
      _
    $region19: #{tpu_custom_call.1} parent=1 // pred_check_branch
      %41 = sbr.rel (0) target = $region21
    $region20: #{tpu_custom_call.1} parent=1 // pred_region
      %42 = dma.done [#allocation6], 512
    $region21: #{tpu_custom_call.1} parent=1 // pred_fallthru
      _
    %v43 = vld [vmem:[#allocation2] sm:$0xff]
    %v44 = vld [vmem:[#allocation2 + $0x8] sm:$0xff]
    %v45 = vld [vmem:[#allocation5] sm:$0xff]
    %v46 = vld [vmem:[#allocation5 + $0x8] sm:$0xff]
    %v47 = vld [vmem:[#allocation5 + $0x10] sm:$0xff]
    %v48 = vld [vmem:[#allocation5 + $0x18] sm:$0xff]
    %v49 = vld [vmem:[%s2] sm:$0x1]
    %v51 = vlaneseq
    %v52 = vshrl.u32 %v51, 7
    %v53 = vsub.s32 0, %v52
    %v54 = vrot.slane %v49, %v53
    %vm56 = vcmask 261120
    %v58 = vsel %vm56, %v43, 0
    %v61 = vsel %vm56, %v44, 0
    %63 = vmatprep.subr.mxu0 0.0
    %64 = vmatpush1.msra.mxu0 %v45
    %65 = vmatprep.subr.mxu0 0.0
    %66 = vmatpush1.msra.mxu0 %v46
    %67 = vmatprep.subr.mxu0 0.0
    %68 = vmatpush1.msra.mxu0 %v47
    %69 = vmatprep.subr.mxu0 0.0
    %70 = vmatpush1.msra.mxu0 %v48
    %71 = vmatprep.subr.mxu0 0.0
    %72 = vmatpush1.msra.mxu0 0.0
    %73 = vmatprep.subr.mxu0 0.0
    %74 = vmatpush1.msra.mxu0 0.0
    %75 = vmatprep.subr.mxu0 0.0
    %76 = vmatpush1.msra.mxu0 0.0
    %77 = vmatprep.subr.mxu0 0.0
    %78 = vmatpush1.msra.mxu0 0.0
    %79 = vmatprep.subr.mxu0 0.0
    %80 = vmatpush1.msra.mxu0 0.0
    %81 = vmatprep.subr.mxu0 0.0
    %82 = vmatpush1.msra.mxu0 0.0
    %83 = vmatprep.subr.mxu0 0.0
    %84 = vmatpush1.msra.mxu0 0.0
    %85 = vmatprep.subr.mxu0 0.0
    %86 = vmatpush1.msra.mxu0 0.0
    %87 = vmatprep.subr.mxu0 0.0
    %88 = vmatpush1.msra.mxu0 0.0
    %89 = vmatprep.subr.mxu0 0.0
    %90 = vmatpush1.msra.mxu0 0.0
    %91 = vmatprep.subr.mxu0 0.0
    %92 = vmatpush1.msra.mxu0 0.0
    %93 = vmatprep.subr.mxu0 0.0
    %94 = vmatpush1.msra.mxu0 0.0
    %95 = vmatprep.subr.mxu0 0.0
    %96 = vmatpush1.msra.mxu0 0.0
    %97 = vmatprep.subr.mxu0 0.0
    %98 = vmatpush1.msra.mxu0 0.0
    %99 = vmatprep.subr.mxu0 0.0
    %100 = vmatpush1.msra.mxu0 0.0
    %101 = vmatprep.subr.mxu0 0.0
    %102 = vmatpush1.msra.mxu0 0.0
    %103 = vmatprep.subr.mxu0 0.0
    %104 = vmatpush1.msra.mxu0 0.0
    %105 = vmatprep.subr.mxu0 0.0
    %106 = vmatpush1.msra.mxu0 0.0
    %107 = vmatprep.subr.mxu0 0.0
    %108 = vmatpush1.msra.mxu0 0.0
    %109 = vmatprep.subr.mxu0 0.0
    %110 = vmatpush1.msra.mxu0 0.0
    %111 = vmatprep.subr.mxu0 0.0
    %112 = vmatpush1.msra.mxu0 0.0
    %113 = vmatprep.subr.mxu0 0.0
    %114 = vmatpush1.msra.mxu0 0.0
    %115 = vmatprep.subr.mxu0 0.0
    %116 = vmatpush1.msra.mxu0 0.0
    %117 = vmatprep.subr.mxu0 0.0
    %118 = vmatpush1.msra.mxu0 0.0
    %119 = vmatprep.subr.mxu0 0.0
    %120 = vmatpush1.msra.mxu0 0.0
    %121 = vmatprep.subr.mxu0 0.0
    %122 = vmatpush1.msra.mxu0 0.0
    %123 = vmatprep.subr.mxu0 0.0
    %124 = vmatpush1.msra.mxu0 0.0
    %125 = vmatprep.subr.mxu0 0.0
    %126 = vmatpush1.msra.mxu0 0.0
    %127 = vmatprep.mubr.f32.mxu0 0.0
    %128 = vmatmul.mubr.f32.gmra.mrb[0].mxu0 %v58
    %v129 = vpop.f32.mrb[0].mxu0
    %v130 = vadd.f32 %v54, %v129
    %v131 = vpop.f32.mrb[0].mxu0
    %132 = vmatprep.mubr.f32.mxu0 0.0
    %133 = vmatmul.mubr.f32.gmra.mrb[0].mxu0 %v61
    %v134 = vpop.f32.mrb[0].mxu0
    %v135 = vadd.f32 %v54, %v134
    %v136 = vpop.f32.mrb[0].mxu0
    %137 = vdwg.mxu0
    %vm138 = vcmask 785408
    %139 = vst.msk [vmem:[#allocation7] sm:$0xff] %vm138, %v130
    %140 = vst.msk [vmem:[#allocation7 + $0x8] sm:$0xff] %vm138, %v135
    // Predicated region
    $region22: #{tpu_custom_call.1} parent=1 // pred_check
      _
    $region23: #{tpu_custom_call.1} parent=1 // pred_check_branch
      %142 = sbr.rel (0) target = $region25
    $region24: #{tpu_custom_call.1} parent=1 // pred_region
      %s144 = ssub.s32 256, 256
      %145 = vsyncadd [#allocation4], %s144
      %s146 = sshll.u32 [#allocation7], 4
      %s147 = int_to_ptr.vmem [resolvable:$true] %s146
      %152 = dma.vmem_to_hbm [thread:$0]  %s147, 256, %s3, [#allocation4], 128, 128, 8
    $region25: #{tpu_custom_call.1} parent=1 // pred_fallthru
      _
    // Predicated region
    $region26: #{tpu_custom_call.1} parent=1 // pred_check
      _
    $region27: #{tpu_custom_call.1} parent=1 // pred_check_branch
      %154 = sbr.rel (0) target = $region29
    $region28: #{tpu_custom_call.1} parent=1 // pred_region
      %155 = dma.done [#allocation4], 256
    $region29: #{tpu_custom_call.1} parent=1 // pred_fallthru
      _
    %156 = vsyncpa [#allocation3], 1
    %157 = vsyncpa [#allocation6], 1
    %158 = vsyncpa [#allocation4], 1

</llo_original>
